<compile_context>
chip_gen: v7x
topology: tpu7x:2x2x1
jax: 0.10.0
libtpu: 0.0.40
codegen_flags: <defaults>
</compile_context>

<pallas_src>
import jax
import jax.numpy as jnp
from jax import lax
from jax.experimental import pallas as pl
from jax.experimental.pallas import tpu as pltpu


def _prompt_encoder_kernel(emb_ref, w_ref, out_ref):
    # emb_ref : [S, H]  Embedding.weight (rows == lookup of arange(S))
    # w_ref   : [H, H]  nn.Linear weight in PyTorch (out, in) layout
    # out_ref : [S, H]  projection = emb @ W.T  (contract emb axis 1 with W axis 1)
    # Dropout is identity at inference.
    # TODO(synk): training-mode dropout (stochastic masking) is not reproduced here.
    proj = lax.dot_general(
        emb_ref[...],
        w_ref[...],
        dimension_numbers=(((1,), (1,)), ((), ())),
        preferred_element_type=jnp.float32,
    )
    out_ref[...] = proj.astype(out_ref.dtype)


def prompt_encoder_forward(embedding_weight, transform_weight, batch_size):
    """embedding_weight: [S, H] float32 (Embedding.weight, rows = virtual tokens)
       transform_weight: [H, H] float32 (nn.Linear weight, PyTorch (out, in) layout)
       returns: [batch_size, S, H] float32
    """
    S, H = embedding_weight.shape

    cost = pl.CostEstimate(
        flops=2 * S * H * H,
        transcendentals=0,
        bytes_accessed=(S * H + H * H + S * H) * 4,
    )

    proj = pl.pallas_call(
        _prompt_encoder_kernel,
        out_shape=jax.ShapeDtypeStruct((S, H), jnp.float32),
        grid=(1,),
        in_specs=[
            # Full-array blocks; S, H are small enough to sit in VMEM directly.
            # (At production H in the 2K-8K range, tile the weight's output dim
            #  instead of using a single (H, H) block.)
            pl.BlockSpec((S, H), lambda i: (0, 0)),
            pl.BlockSpec((H, H), lambda i: (0, 0)),
        ],
        out_specs=pl.BlockSpec((S, H), lambda i: (0, 0)),
        compiler_params=pltpu.CompilerParams(
            dimension_semantics=("arbitrary",),
        ),
        cost_estimate=cost,
    )(embedding_weight, transform_weight)

    # `projection.repeat(batch_size, 1, 1)` == broadcast along a new batch axis.
    # Done in the wrapper so XLA can fuse it; no redundant kernel work or writes.
    return jnp.broadcast_to(proj[None], (batch_size, S, H))


def prompt_encoder_reference(embedding_weight, transform_weight, batch_size):
    proj = embedding_weight @ transform_weight.T
    return jnp.broadcast_to(proj[None], (batch_size,) + proj.shape)


if __name__ == "__main__":
    # Small shapes implied by the module: prompt sequence length S, hidden size H.
    batch_size = 2
    S = 8        # prompt sequence length (len of init_token_ids)
    H = 32       # config.hidden_size

    key = jax.random.PRNGKey(0)
    k_emb, k_w = jax.random.split(key)

    # Deterministic synthetic parameters (stand-ins for word-embedding-initialized
    # Embedding.weight and the Linear transform weight).
    embedding_weight = jax.random.normal(k_emb, (S, H), dtype=jnp.float32)
    transform_weight = jax.random.normal(k_w, (H, H), dtype=jnp.float32) * 0.02

    out = prompt_encoder_forward(embedding_weight, transform_weight, batch_size)
    out = jax.block_until_ready(out)

    ref = prompt_encoder_reference(embedding_weight, transform_weight, batch_size)
    assert out.shape == (batch_size, S, H)
    assert jnp.allclose(out, ref, atol=1e-5, rtol=1e-5)

    print("KERNEL_OK")
</pallas_src>

<mosaic_0001>
module attributes {stable_mosaic.version = 11 : i64} {
  func.func @_prompt_encoder_kernel(%arg0: i32, %arg1: memref<8x32xf32, #tpu.memory_space<vmem>>, %arg2: memref<32x32xf32, #tpu.memory_space<vmem>>, %arg3: memref<8x32xf32, #tpu.memory_space<vmem>>) attributes {dimension_semantics = [#tpu.dimension_semantics<arbitrary>], iteration_bounds = array<i64: 1>, scalar_prefetch = 0 : i64, scratch_operands = 0 : i64, tpu.core_type = #tpu.core_type<tc>, window_params = [{pipeline_mode = #tpu.pipeline_mode<synchronous>, transform_indices = @transform_0, window_bounds = array<i64: 8, 32>}, {pipeline_mode = #tpu.pipeline_mode<synchronous>, transform_indices = @transform_1, window_bounds = array<i64: 32, 32>}, {pipeline_mode = #tpu.pipeline_mode<synchronous>, transform_indices = @transform_2, window_bounds = array<i64: 8, 32>}]} {
    %c0 = arith.constant 0 : index
    %c0_0 = arith.constant 0 : index
    %0 = vector.load %arg1[%c0, %c0_0] : memref<8x32xf32, #tpu.memory_space<vmem>>, vector<8x32xf32>
    %c0_1 = arith.constant 0 : index
    %c0_2 = arith.constant 0 : index
    %1 = vector.load %arg2[%c0_1, %c0_2] : memref<32x32xf32, #tpu.memory_space<vmem>>, vector<32x32xf32>
    %cst = arith.constant dense<0.000000e+00> : vector<8x32xf32>
    %2 = tpu.matmul %0, %1, %cst {dimension_numbers = #tpu.dot_dimension_numbers<[1], [1], [0], [0], [0, 0, 1, 0], [], []>} : vector<8x32xf32>, vector<32x32xf32>, vector<8x32xf32> -> vector<8x32xf32>
    %c0_3 = arith.constant 0 : index
    %c0_4 = arith.constant 0 : index
    %3 = vector.load %arg3[%c0_3, %c0_4] : memref<8x32xf32, #tpu.memory_space<vmem>>, vector<8x32xf32>
    tpu.vector_store %arg3[%c0_3, %c0_4], %2 {strides = array<i32>} : memref<8x32xf32, #tpu.memory_space<vmem>>, vector<8x32xf32>,
    return
  }
  func.func @transform_0(%arg0: i32) -> (i32, i32) {
    %c0_i32 = arith.constant 0 : i32
    %c0_i32_0 = arith.constant 0 : i32
    %c0_i32_1 = arith.constant 0 : i32
    return %c0_i32, %c0_i32_0 : i32, i32
  }
  func.func @transform_1(%arg0: i32) -> (i32, i32) {
    %c0_i32 = arith.constant 0 : i32
    %c0_i32_0 = arith.constant 0 : i32
    %c0_i32_1 = arith.constant 0 : i32
    return %c0_i32, %c0_i32_0 : i32, i32
  }
  func.func @transform_2(%arg0: i32) -> (i32, i32) {
    %c0_i32 = arith.constant 0 : i32
    %c0_i32_0 = arith.constant 0 : i32
    %c0_i32_1 = arith.constant 0 : i32
    return %c0_i32, %c0_i32_0 : i32, i32
  }
}

</mosaic_0001>

<llo_original>
// kernel: tpu_custom_call.1
$region0: #{tpu_custom_call.1}
  #allocation0 [shape = 'u32[]', space=smem, size = 0x4, offset = 0x4, fixed_abs, tag = 'smem constant byte address 0x4 - core index']
  #allocation1 [shape = 'u32[144,128]{1,0:T(1,128)}', space=vmem, size = 0x12000, scoped, tag = 'internal scratch']
  %s0 = inlined_call_operand.hbm [shape: f32[8,32], index: 0, kind: input, shape index: {}]
  %s1 = inlined_call_operand.hbm [shape: f32[32,32], index: 1, kind: input, shape index: {}]
  %s2 = inlined_call_operand.hbm [shape: f32[8,32], index: 2, kind: output, shape index: {}]
  %s3 = sld [smem:[#allocation0]]
  $region26: #{tpu_custom_call.1} parent=0
    _
  %s5 = ssub.s32 1, %s3
  %s6 = scalar_select 0, %s5, %s3
  $region1: #{tpu_custom_call.1} parent=0
    #allocation2 [shape = 'u8[4096]{0}', space=vmem, size = 0x1000, scoped, tag = 'input window, operand 0, single buffered']
    #allocation3 [shape = 's32[1]{0}', space=sflag, size = 0x4, scoped, tag = 'scoped memory for tpu_custom_call.1']
    #allocation4 [shape = 's32[1]{0}', space=sflag, size = 0x4, scoped, tag = 'scoped memory for tpu_custom_call.1']
    #allocation5 [shape = 'u8[16384]{0}', space=vmem, size = 0x4000, scoped, tag = 'input window, operand 1, single buffered']
    #allocation6 [shape = 's32[1]{0}', space=sflag, size = 0x4, scoped, tag = 'scoped memory for tpu_custom_call.1']
    #allocation7 [shape = 'u8[4096]{0}', space=vmem, size = 0x1000, scoped, tag = 'output window, operand 0, single buffered']
    %7 = vsyncpa [#allocation3], 0
    %8 = vsyncpa [#allocation6], 0
    %9 = vsyncpa [#allocation4], 0
    // Predicated region
    $region2: #{tpu_custom_call.1} parent=1 // pred_check
      _
    $region3: #{tpu_custom_call.1} parent=1 // pred_check_branch
      %11 = sbr.rel (0) target = $region5
    $region4: #{tpu_custom_call.1} parent=1 // pred_region
      %s13 = ssub.s32 128, 128
      %14 = vsyncadd [#allocation3], %s13
      %s16 = sshll.u32 [#allocation2], 4
      %s17 = int_to_ptr.vmem [resolvable:$true] %s16
      %19 = dma.hbm_to_vmem [thread:$0]  %s0, 128, %s17, [#allocation3]
    $region5: #{tpu_custom_call.1} parent=1 // pred_fallthru
      _
    // Predicated region
    $region6: #{tpu_custom_call.1} parent=1 // pred_check
      _
    $region7: #{tpu_custom_call.1} parent=1 // pred_check_branch
      %21 = sbr.rel (0) target = $region9
    $region8: #{tpu_custom_call.1} parent=1 // pred_region
      %s23 = ssub.s32 512, 512
      %24 = vsyncadd [#allocation6], %s23
      %s25 = sshll.u32 [#allocation5], 4
      %s26 = int_to_ptr.vmem [resolvable:$true] %s25
      %31 = dma.hbm_to_vmem [thread:$0]  %s1, 512, %s26, [#allocation6], 128, 128, 8
    $region9: #{tpu_custom_call.1} parent=1 // pred_fallthru
      _
    // Predicated region
    $region10: #{tpu_custom_call.1} parent=1 // pred_check
      _
    $region11: #{tpu_custom_call.1} parent=1 // pred_check_branch
      %33 = sbr.rel (0) target = $region13
    $region12: #{tpu_custom_call.1} parent=1 // pred_region
      %34 = dma.done [#allocation3], 128
    $region13: #{tpu_custom_call.1} parent=1 // pred_fallthru
      _
    // Predicated region
    $region14: #{tpu_custom_call.1} parent=1 // pred_check
      _
    $region15: #{tpu_custom_call.1} parent=1 // pred_check_branch
      %36 = sbr.rel (0) target = $region17
    $region16: #{tpu_custom_call.1} parent=1 // pred_region
      %37 = dma.done [#allocation6], 512
    $region17: #{tpu_custom_call.1} parent=1 // pred_fallthru
      _
    %v38 = vld [vmem:[#allocation2] sm:$0xff]
    %v39 = vld [vmem:[#allocation5] sm:$0xff]
    %v40 = vld [vmem:[#allocation5 + $0x8] sm:$0xff]
    %v41 = vld [vmem:[#allocation5 + $0x10] sm:$0xff]
    %v42 = vld [vmem:[#allocation5 + $0x18] sm:$0xff]
    %vm43 = vcmask 261120
    %v45 = vsel %vm43, %v38, 0
    %v48 = vsel %vm43, %v39, 0
    %v51 = vsel %vm43, %v40, 0
    %v54 = vsel %vm43, %v41, 0
    %v57 = vsel %vm43, %v42, 0
    %59 = vmatprep.subr.mxu0 0.0
    %60 = vmatpush1.xpose.msra.mxu0 %v48
    %61 = vmatprep.subr.mxu0 0.0
    %62 = vmatpush1.xpose.msra.mxu0 %v51
    %63 = vmatprep.subr.mxu0 0.0
    %64 = vmatpush1.xpose.msra.mxu0 %v54
    %65 = vmatprep.subr.mxu0 0.0
    %66 = vmatpush1.xpose.msra.mxu0 %v57
    %67 = vmatprep.subr.mxu0 0.0
    %68 = vmatpush1.xpose.msra.mxu0 0.0
    %69 = vmatprep.subr.mxu0 0.0
    %70 = vmatpush1.xpose.msra.mxu0 0.0
    %71 = vmatprep.subr.mxu0 0.0
    %72 = vmatpush1.xpose.msra.mxu0 0.0
    %73 = vmatprep.subr.mxu0 0.0
    %74 = vmatpush1.xpose.msra.mxu0 0.0
    %75 = vmatprep.subr.mxu0 0.0
    %76 = vmatpush1.xpose.msra.mxu0 0.0
    %77 = vmatprep.subr.mxu0 0.0
    %78 = vmatpush1.xpose.msra.mxu0 0.0
    %79 = vmatprep.subr.mxu0 0.0
    %80 = vmatpush1.xpose.msra.mxu0 0.0
    %81 = vmatprep.subr.mxu0 0.0
    %82 = vmatpush1.xpose.msra.mxu0 0.0
    %83 = vmatprep.subr.mxu0 0.0
    %84 = vmatpush1.xpose.msra.mxu0 0.0
    %85 = vmatprep.subr.mxu0 0.0
    %86 = vmatpush1.xpose.msra.mxu0 0.0
    %87 = vmatprep.subr.mxu0 0.0
    %88 = vmatpush1.xpose.msra.mxu0 0.0
    %89 = vmatprep.subr.mxu0 0.0
    %90 = vmatpush1.xpose.msra.mxu0 0.0
    %91 = vmatprep.subr.mxu0 0.0
    %92 = vmatpush1.xpose.msra.mxu0 0.0
    %93 = vmatprep.subr.mxu0 0.0
    %94 = vmatpush1.xpose.msra.mxu0 0.0
    %95 = vmatprep.subr.mxu0 0.0
    %96 = vmatpush1.xpose.msra.mxu0 0.0
    %97 = vmatprep.subr.mxu0 0.0
    %98 = vmatpush1.xpose.msra.mxu0 0.0
    %99 = vmatprep.subr.mxu0 0.0
    %100 = vmatpush1.xpose.msra.mxu0 0.0
    %101 = vmatprep.subr.mxu0 0.0
    %102 = vmatpush1.xpose.msra.mxu0 0.0
    %103 = vmatprep.subr.mxu0 0.0
    %104 = vmatpush1.xpose.msra.mxu0 0.0
    %105 = vmatprep.subr.mxu0 0.0
    %106 = vmatpush1.xpose.msra.mxu0 0.0
    %107 = vmatprep.subr.mxu0 0.0
    %108 = vmatpush1.xpose.msra.mxu0 0.0
    %109 = vmatprep.subr.mxu0 0.0
    %110 = vmatpush1.xpose.msra.mxu0 0.0
    %111 = vmatprep.subr.mxu0 0.0
    %112 = vmatpush1.xpose.msra.mxu0 0.0
    %113 = vmatprep.subr.mxu0 0.0
    %114 = vmatpush1.xpose.msra.mxu0 0.0
    %115 = vmatprep.subr.mxu0 0.0
    %116 = vmatpush1.xpose.msra.mxu0 0.0
    %117 = vmatprep.subr.mxu0 0.0
    %118 = vmatpush1.xpose.msra.mxu0 0.0
    %119 = vmatprep.subr.mxu0 0.0
    %120 = vmatpush1.xpose.msra.mxu0 0.0
    %121 = vmatprep.subr.mxu0 0.0
    %122 = vmatpush1.xpose.msra.mxu0 0.0
    %123 = vmatprep.mubr.f32.mxu0 0.0
    %124 = vmatmul.mubr.f32.gmra.mrb[0].mxu0 %v45
    %v125 = vpop.f32.mrb[0].mxu0
    %v126 = vadd.f32 0.0, %v125
    %v127 = vpop.f32.mrb[0].mxu0
    %128 = vdwg.mxu0
    %129 = vst.msk [vmem:[#allocation7] sm:$0xff] %vm43, %v126
    // Predicated region
    $region18: #{tpu_custom_call.1} parent=1 // pred_check
      _
    $region19: #{tpu_custom_call.1} parent=1 // pred_check_branch
      %131 = sbr.rel (0) target = $region21
    $region20: #{tpu_custom_call.1} parent=1 // pred_region
      %s133 = ssub.s32 128, 128
      %134 = vsyncadd [#allocation4], %s133
      %s136 = sshll.u32 [#allocation7], 4
      %s137 = int_to_ptr.vmem [resolvable:$true] %s136
      %139 = dma.vmem_to_hbm [thread:$0]  %s137, 128, %s2, [#allocation4]
    $region21: #{tpu_custom_call.1} parent=1 // pred_fallthru
      _
    // Predicated region
    $region22: #{tpu_custom_call.1} parent=1 // pred_check
      _
    $region23: #{tpu_custom_call.1} parent=1 // pred_check_branch
      %141 = sbr.rel (0) target = $region25
    $region24: #{tpu_custom_call.1} parent=1 // pred_region
      %142 = dma.done [#allocation4], 128
    $region25: #{tpu_custom_call.1} parent=1 // pred_fallthru
      _
    %143 = vsyncpa [#allocation3], 1
    %144 = vsyncpa [#allocation6], 1
    %145 = vsyncpa [#allocation4], 1

</llo_original>
